<compile_context>
chip_gen: v6e
topology: v6e:2x2x1
jax: 0.10.0
libtpu: 0.0.40
codegen_flags: <defaults>
</compile_context>

<pallas_src>
import functools
import math

import jax
import jax.numpy as jnp
from jax.experimental import pallas as pl
from jax.experimental.pallas import tpu as pltpu


def _se_kernel(x_ref, w1t_ref, b1_ref, w2t_ref, b2_ref, o_ref, *, inv_hw: float):
    # x_ref: (tb, Ce, HW); w1t_ref: (Ce, mide); b1_ref: (1, mide) f32;
    # w2t_ref: (mide, Ce); b2_ref: (1, Ce) f32.
    x = x_ref[...]

    # --- squeeze: global average pool, f32 accumulation (no full-block f32 copy) ---
    pooled = jnp.sum(x, axis=-1, dtype=jnp.float32) * inv_hw          # (tb, Ce) f32

    # --- excitation: channel matmul -> Swish -> channel matmul -> sigmoid ---
    # Matmul operands in the weights' native dtype (bf16 MXU path for bf16 nets),
    # f32 accumulation; biases are passed in f32.
    w1t = w1t_ref[...]
    p = pooled if pooled.dtype == w1t.dtype else pooled.astype(w1t.dtype)
    h = jnp.dot(p, w1t, preferred_element_type=jnp.float32) + b1_ref[...]
    h = h * jax.nn.sigmoid(h)                                         # Swish
    w2t = w2t_ref[...]
    h = h if h.dtype == w2t.dtype else h.astype(w2t.dtype)
    s = jnp.dot(h, w2t, preferred_element_type=jnp.float32) + b2_ref[...]

    # Cast the gate to x.dtype BEFORE the big broadcast multiply so the dominant
    # (tb, Ce, HW) elementwise pass stays in the input dtype (bf16-friendly).
    gate = jax.nn.sigmoid(s).astype(x.dtype)                          # (tb, Ce)

    # --- scale: broadcast gate over spatial positions ---
    o_ref[...] = (x * gate[:, :, None]).astype(o_ref.dtype)


def _vmem_capacity_bytes() -> int:
    """Physical VMEM of the local TensorCore; conservative 64 MiB if unknown."""
    try:
        return int(pltpu.get_tpu_info().vmem_capacity_bytes)
    except Exception:
        return 64 << 20


def se_block(x_nchw, w1, b1, w2, b2, *, max_batch_block=None):
    """SEBlock forward.

    x_nchw: (N, C, H, W); w1: (mid, C), b1: (mid,), w2: (C, mid), b2: (C,).
    max_batch_block: optional cap on images(-groups) per grid step (testing knob).
    """
    N, C, H, W = x_nchw.shape
    mid = w1.shape[0]
    HW = H * W
    dtype = x_nchw.dtype
    itemsize = jnp.dtype(dtype).itemsize

    # ---- sublane packing: fold g images into the channel axis so the sublane dim
    #      (second-minor) is a multiple of 8.  Free reshape of contiguous NCHW. ----
    g = 8 // math.gcd(C, 8)
    if g > 1 and N % g != 0:
        # Fall back to padded sublanes rather than padding N (an extra HBM pass).
        g = 1
    Ce, mide, Ng = g * C, g * mid, N // g

    x_in = x_nchw.reshape(Ng, Ce, HW)                 # free: same contiguous buffer

    # 1x1 convs == channel matmuls.  Build (block-diagonal when g > 1) operands once,
    # in the weights' native dtype; biases in f32 (tiny).
    w1t = jnp.kron(jnp.eye(g, dtype=w1.dtype), jnp.transpose(w1))     # (Ce, mide)
    w2t = jnp.kron(jnp.eye(g, dtype=w2.dtype), jnp.transpose(w2))     # (mide, Ce)
    b1e = jnp.tile(b1.astype(jnp.float32), g).reshape(1, mide)
    b2e = jnp.tile(b2.astype(jnp.float32), g).reshape(1, Ce)

    # ---- generation-aware block sizing ----
    vmem_cap = _vmem_capacity_bytes()                 # 128 MiB (v5e/v6e) / 64 MiB (v7x)
    two_tc = vmem_cap < (96 << 20)                    # 64 MiB parts (v7x-like) have 2 TCs
    block_target = max(1 << 20, vmem_cap // 10)       # ~6.4 MiB (v7x) / ~12.8 MiB (v5e/v6e)

    row_bytes = Ce * HW * itemsize                    # one (Ce, HW) slab
    tb = max(1, min(Ng, block_target // max(row_bytes, 1)))
    if two_tc and Ng >= 2:
        tb = min(tb, -(-Ng // 2))                     # >= 2 grid steps (one per TC)
        steps = -(-Ng // tb)
        if steps % 2:                                  # prefer an even split across 2 TCs
            tb_even = max(1, -(-Ng // (steps + 1)))
            if (-(-Ng // tb_even)) % 2 == 0:
                tb = tb_even
    if max_batch_block is not None:
        tb = max(1, min(tb, int(max_batch_block)))
    grid = (pl.cdiv(Ng, tb),)
    block_shape = (tb, Ce, HW)

    # ---- VMEM budget: double-buffered in+out blocks + weights + headroom, capped
    #      well below physical VMEM (leaves room for compiler scratch/semaphores).
    #      If a single (Ce, HW) slab exceeds the target this may under-provision:
    #      see TODO(synk) two-pass variant at the top of the file. ----
    block_bytes = tb * row_bytes
    vmem_limit = int(min(0.8 * vmem_cap, max(32 << 20, 4 * block_bytes + (16 << 20))))

    kernel = functools.partial(_se_kernel, inv_hw=1.0 / HW)

    out = pl.pallas_call(
        kernel,
        out_shape=jax.ShapeDtypeStruct(x_in.shape, dtype),
        grid_spec=pltpu.PrefetchScalarGridSpec(
            num_scalar_prefetch=0,
            grid=grid,
            in_specs=[
                pl.BlockSpec(block_shape, lambda n: (n, 0, 0)),
                pl.BlockSpec((Ce, mide), lambda n: (0, 0)),
                pl.BlockSpec((1, mide), lambda n: (0, 0)),
                pl.BlockSpec((mide, Ce), lambda n: (0, 0)),
                pl.BlockSpec((1, Ce), lambda n: (0, 0)),
            ],
            out_specs=pl.BlockSpec(block_shape, lambda n: (n, 0, 0)),
        ),
        compiler_params=pltpu.CompilerParams(
            dimension_semantics=("parallel",),
            vmem_limit_bytes=vmem_limit,
        ),
    )(x_in, w1t, b1e, w2t, b2e)

    return out.reshape(N, C, H, W)                    # free: same contiguous buffer


def se_block_ref(x, w1, b1, w2, b2):
    """Pure-JAX reference mirroring the PyTorch forward (computed in f32)."""
    xf = x.astype(jnp.float32)
    pooled = jnp.mean(xf, axis=(2, 3))                                # (N, C)
    h = pooled @ w1.astype(jnp.float32).T + b1.astype(jnp.float32)
    h = h * jax.nn.sigmoid(h)                                         # Swish
    s = h @ w2.astype(jnp.float32).T + b2.astype(jnp.float32)
    gate = jax.nn.sigmoid(s)                                          # (N, C)
    return (xf * gate[:, :, None, None]).astype(x.dtype)


def _make_params(key, C, ratio, dtype):
    mid = math.ceil(C / ratio)
    kw1, kb1, kw2, kb2 = jax.random.split(key, 4)
    w1 = (jax.random.normal(kw1, (mid, C), dtype=jnp.float32) * 0.5).astype(dtype)
    b1 = (jax.random.normal(kb1, (mid,), dtype=jnp.float32) * 0.1).astype(dtype)
    w2 = (jax.random.normal(kw2, (C, mid), dtype=jnp.float32) * 0.5).astype(dtype)
    b2 = (jax.random.normal(kb2, (C,), dtype=jnp.float32) * 0.1).astype(dtype)
    return w1, b1, w2, b2


if __name__ == "__main__":
    key = jax.random.PRNGKey(0)
    k_main, k_cl, k_rag = jax.random.split(key, 3)

    # --- main config (matches module: in_channels=4, ratio=16 -> mid=1), f32 ---
    # C=4 -> g=2 sublane-packing path (channels folded to 8), no wrapper transposes.
    N, C, H, W = 2, 4, 16, 16
    kx, kp = jax.random.split(k_main, 2)
    x = jax.random.normal(kx, (N, C, H, W), dtype=jnp.float32)
    w1, b1, w2, b2 = _make_params(kp, C, ratio=16, dtype=jnp.float32)

    out = jax.block_until_ready(se_block(x, w1, b1, w2, b2))
    ref = se_block_ref(x, w1, b1, w2, b2)
    assert out.shape == (N, C, H, W)
    assert jnp.allclose(out, ref, atol=1e-5, rtol=1e-5)

    # --- bf16 config: C=128 (g=1, fully packed sublanes), HW=49 (masked stores OK) ---
    N2, C2, H2, W2 = 4, 128, 7, 7
    kx2, kp2 = jax.random.split(k_cl, 2)
    x2 = jax.random.normal(kx2, (N2, C2, H2, W2), dtype=jnp.float32).astype(jnp.bfloat16)
    w1b, b1b, w2b, b2b = _make_params(kp2, C2, ratio=16, dtype=jnp.bfloat16)

    out2 = jax.block_until_ready(se_block(x2, w1b, b1b, w2b, b2b))
    ref2 = se_block_ref(x2, w1b, b1b, w2b, b2b)
    assert out2.shape == (N2, C2, H2, W2)
    assert jnp.allclose(out2.astype(jnp.float32), ref2.astype(jnp.float32),
                        atol=3e-2, rtol=3e-2)

    # --- ragged-batch config: N=3 with a forced 2-image block -> padded last block ---
    N3, C3, H3, W3 = 3, 8, 8, 8
    kx3, kp3 = jax.random.split(k_rag, 2)
    x3 = jax.random.normal(kx3, (N3, C3, H3, W3), dtype=jnp.float32)
    w1c, b1c, w2c, b2c = _make_params(kp3, C3, ratio=16, dtype=jnp.float32)

    out3 = jax.block_until_ready(se_block(x3, w1c, b1c, w2c, b2c, max_batch_block=2))
    ref3 = se_block_ref(x3, w1c, b1c, w2c, b2c)
    assert out3.shape == (N3, C3, H3, W3)
    assert jnp.allclose(out3, ref3, atol=1e-5, rtol=1e-5)

    print("KERNEL_OK")
</pallas_src>

<mosaic_0001>
module attributes {stable_mosaic.version = 11 : i64} {
  func.func @_se_kernel(%arg0: i32, %arg1: memref<1x8x256xf32, #tpu.memory_space<vmem>>, %arg2: memref<8x2xf32, #tpu.memory_space<vmem>>, %arg3: memref<1x2xf32, #tpu.memory_space<vmem>>, %arg4: memref<2x8xf32, #tpu.memory_space<vmem>>, %arg5: memref<1x8xf32, #tpu.memory_space<vmem>>, %arg6: memref<1x8x256xf32, #tpu.memory_space<vmem>>) attributes {dimension_semantics = [#tpu.dimension_semantics<parallel>], iteration_bounds = array<i64: 1>, scalar_prefetch = 0 : i64, scratch_operands = 0 : i64, tpu.core_type = #tpu.core_type<tc>, window_params = [{transform_indices = @transform_0, window_bounds = array<i64: 1, 8, 256>}, {pipeline_mode = #tpu.pipeline_mode<synchronous>, transform_indices = @transform_1, window_bounds = array<i64: 8, 2>}, {pipeline_mode = #tpu.pipeline_mode<synchronous>, transform_indices = @transform_2, window_bounds = array<i64: 1, 2>}, {pipeline_mode = #tpu.pipeline_mode<synchronous>, transform_indices = @transform_3, window_bounds = array<i64: 2, 8>}, {pipeline_mode = #tpu.pipeline_mode<synchronous>, transform_indices = @transform_4, window_bounds = array<i64: 1, 8>}, {transform_indices = @transform_5, window_bounds = array<i64: 1, 8, 256>}]} {
    %c0 = arith.constant 0 : index
    %c0_0 = arith.constant 0 : index
    %c0_1 = arith.constant 0 : index
    %0 = vector.load %arg1[%c0, %c0_0, %c0_1] : memref<1x8x256xf32, #tpu.memory_space<vmem>>, vector<1x8x256xf32>
    %cst = arith.constant dense<0.000000e+00> : vector<1x8xf32>
    %1 = vector.multi_reduction <add>, %0, %cst [2] : vector<1x8x256xf32> to vector<1x8xf32>
    %cst_2 = arith.constant 3.906250e-03 : f32
    %2 = vector.broadcast %cst_2 : f32 to vector<1x8xf32>
    %3 = arith.mulf %1, %2 : vector<1x8xf32>
    %c0_3 = arith.constant 0 : index
    %c0_4 = arith.constant 0 : index
    %4 = vector.load %arg2[%c0_3, %c0_4] : memref<8x2xf32, #tpu.memory_space<vmem>>, vector<8x2xf32>
    %cst_5 = arith.constant dense<0.000000e+00> : vector<1x2xf32>
    %5 = tpu.matmul %3, %4, %cst_5 {dimension_numbers = #tpu.dot_dimension_numbers<[1], [0], [0], [1], [0, 0, 1, 1], [], []>} : vector<1x8xf32>, vector<8x2xf32>, vector<1x2xf32> -> vector<1x2xf32>
    %c0_6 = arith.constant 0 : index
    %c0_7 = arith.constant 0 : index
    %6 = vector.load %arg3[%c0_6, %c0_7] : memref<1x2xf32, #tpu.memory_space<vmem>>, vector<1x2xf32>
    %7 = arith.addf %5, %6 : vector<1x2xf32>
    %8 = arith.negf %7 : vector<1x2xf32>
    %9 = math.exp %8 : vector<1x2xf32>
    %cst_8 = arith.constant 1.000000e+00 : f32
    %10 = vector.broadcast %cst_8 : f32 to vector<1x2xf32>
    %11 = arith.addf %10, %9 : vector<1x2xf32>
    %12 = arith.divf %10, %11 : vector<1x2xf32>
    %13 = arith.mulf %7, %12 : vector<1x2xf32>
    %c0_9 = arith.constant 0 : index
    %c0_10 = arith.constant 0 : index
    %14 = vector.load %arg4[%c0_9, %c0_10] : memref<2x8xf32, #tpu.memory_space<vmem>>, vector<2x8xf32>
    %cst_11 = arith.constant dense<0.000000e+00> : vector<1x8xf32>
    %15 = tpu.matmul %13, %14, %cst_11 {dimension_numbers = #tpu.dot_dimension_numbers<[1], [0], [0], [1], [0, 0, 1, 1], [], []>} : vector<1x2xf32>, vector<2x8xf32>, vector<1x8xf32> -> vector<1x8xf32>
    %c0_12 = arith.constant 0 : index
    %c0_13 = arith.constant 0 : index
    %16 = vector.load %arg5[%c0_12, %c0_13] : memref<1x8xf32, #tpu.memory_space<vmem>>, vector<1x8xf32>
    %17 = arith.addf %15, %16 : vector<1x8xf32>
    %18 = arith.negf %17 : vector<1x8xf32>
    %19 = math.exp %18 : vector<1x8xf32>
    %cst_14 = arith.constant 1.000000e+00 : f32
    %20 = vector.broadcast %cst_14 : f32 to vector<1x8xf32>
    %21 = arith.addf %20, %19 : vector<1x8xf32>
    %22 = arith.divf %20, %21 : vector<1x8xf32>
    %23 = vector.shape_cast %22 : vector<1x8xf32> to vector<1x8x1xf32>
    %24 = vector.broadcast %23 : vector<1x8x1xf32> to vector<1x8x256xf32>
    %25 = arith.mulf %0, %24 : vector<1x8x256xf32>
    %c0_15 = arith.constant 0 : index
    %c0_16 = arith.constant 0 : index
    %c0_17 = arith.constant 0 : index
    %26 = vector.load %arg6[%c0_15, %c0_16, %c0_17] : memref<1x8x256xf32, #tpu.memory_space<vmem>>, vector<1x8x256xf32>
    tpu.vector_store %arg6[%c0_15, %c0_16, %c0_17], %25 {strides = array<i32>} : memref<1x8x256xf32, #tpu.memory_space<vmem>>, vector<1x8x256xf32>,
    return
  }
  func.func @transform_0(%arg0: i32) -> (i32, i32, i32) {
    %c0_i32 = arith.constant 0 : i32
    %c0_i32_0 = arith.constant 0 : i32
    %c0_i32_1 = arith.constant 0 : i32
    return %arg0, %c0_i32, %c0_i32_0 : i32, i32, i32
  }
  func.func @transform_1(%arg0: i32) -> (i32, i32) {
    %c0_i32 = arith.constant 0 : i32
    %c0_i32_0 = arith.constant 0 : i32
    %c0_i32_1 = arith.constant 0 : i32
    return %c0_i32, %c0_i32_0 : i32, i32
  }
  func.func @transform_2(%arg0: i32) -> (i32, i32) {
    %c0_i32 = arith.constant 0 : i32
    %c0_i32_0 = arith.constant 0 : i32
    %c0_i32_1 = arith.constant 0 : i32
    return %c0_i32, %c0_i32_0 : i32, i32
  }
  func.func @transform_3(%arg0: i32) -> (i32, i32) {
    %c0_i32 = arith.constant 0 : i32
    %c0_i32_0 = arith.constant 0 : i32
    %c0_i32_1 = arith.constant 0 : i32
    return %c0_i32, %c0_i32_0 : i32, i32
  }
  func.func @transform_4(%arg0: i32) -> (i32, i32) {
    %c0_i32 = arith.constant 0 : i32
    %c0_i32_0 = arith.constant 0 : i32
    %c0_i32_1 = arith.constant 0 : i32
    return %c0_i32, %c0_i32_0 : i32, i32
  }
  func.func @transform_5(%arg0: i32) -> (i32, i32, i32) {
    %c0_i32 = arith.constant 0 : i32
    %c0_i32_0 = arith.constant 0 : i32
    %c0_i32_1 = arith.constant 0 : i32
    return %arg0, %c0_i32, %c0_i32_0 : i32, i32, i32
  }
}

</mosaic_0001>

<llo_original>
// kernel: tpu_custom_call.1
$region0: #{tpu_custom_call.1}
  #allocation0 [shape = 'u32[]', space=smem, size = 0x4, offset = 0x4, fixed_abs, tag = 'smem constant byte address 0x4 - core index']
  #allocation1 [shape = 'u32[144,128]{1,0:T(1,128)}', space=vmem, size = 0x12000, scoped, tag = 'internal scratch']
  %s0 = inlined_call_operand.hbm [shape: f32[1,8,256], index: 0, kind: input, shape index: {}]
  %s1 = inlined_call_operand.vmem [shape: f32[8,2], index: 1, kind: input, shape index: {}]
  %s2 = inlined_call_operand.vmem [shape: f32[1,2], index: 2, kind: input, shape index: {}]
  %s3 = inlined_call_operand.vmem [shape: f32[2,8], index: 3, kind: input, shape index: {}]
  %s4 = inlined_call_operand.vmem [shape: f32[1,8], index: 4, kind: input, shape index: {}]
  %s5 = inlined_call_operand.hbm [shape: f32[1,8,256], index: 5, kind: output, shape index: {}]
  %s6 = sld [smem:[#allocation0]]
  $region34: #{tpu_custom_call.1} parent=0
    _
  %s8 = ssub.s32 1, %s6
  %s9 = scalar_select 0, %s8, %s6
  $region1: #{tpu_custom_call.1} parent=0
    #allocation2 [shape = 'u8[8192]{0}', space=vmem, size = 0x2000, scoped, tag = 'input window, operand 0, single buffered']
    #allocation3 [shape = 's32[1]{0}', space=sflag, size = 0x4, scoped, tag = 'scoped memory for tpu_custom_call.1']
    #allocation4 [shape = 's32[1]{0}', space=sflag, size = 0x4, scoped, tag = 'scoped memory for tpu_custom_call.1']
    #allocation5 [shape = 'u8[8192]{0}', space=vmem, size = 0x2000, scoped, tag = 'output window, operand 0, single buffered']
    %10 = vsyncpa [#allocation3], 0
    %11 = vsyncpa [#allocation4], 0
    // Predicated region
    $region2: #{tpu_custom_call.1} parent=1 // pred_check
      _
    $region3: #{tpu_custom_call.1} parent=1 // pred_check_branch
      %13 = sbr.rel (0) target = $region5
    $region4: #{tpu_custom_call.1} parent=1 // pred_region
      %s15 = ssub.s32 256, 256
      %16 = vsyncadd [#allocation3], %s15
      %s18 = sshll.u32 [#allocation2], 4
      %s19 = int_to_ptr.vmem [resolvable:$true] %s18
      %21 = dma.hbm_to_vmem [thread:$0]  %s0, 256, %s19, [#allocation3]
    $region5: #{tpu_custom_call.1} parent=1 // pred_fallthru
      _
    // Predicated region
    $region6: #{tpu_custom_call.1} parent=1 // pred_check
      _
    $region7: #{tpu_custom_call.1} parent=1 // pred_check_branch
      %23 = sbr.rel (0) target = $region9
    $region8: #{tpu_custom_call.1} parent=1 // pred_region
      _
    $region9: #{tpu_custom_call.1} parent=1 // pred_fallthru
      _
    // Predicated region
    $region10: #{tpu_custom_call.1} parent=1 // pred_check
      _
    $region11: #{tpu_custom_call.1} parent=1 // pred_check_branch
      %25 = sbr.rel (0) target = $region13
    $region12: #{tpu_custom_call.1} parent=1 // pred_region
      _
    $region13: #{tpu_custom_call.1} parent=1 // pred_fallthru
      _
    // Predicated region
    $region14: #{tpu_custom_call.1} parent=1 // pred_check
      _
    $region15: #{tpu_custom_call.1} parent=1 // pred_check_branch
      %27 = sbr.rel (0) target = $region17
    $region16: #{tpu_custom_call.1} parent=1 // pred_region
      _
    $region17: #{tpu_custom_call.1} parent=1 // pred_fallthru
      _
    // Predicated region
    $region18: #{tpu_custom_call.1} parent=1 // pred_check
      _
    $region19: #{tpu_custom_call.1} parent=1 // pred_check_branch
      %29 = sbr.rel (0) target = $region21
    $region20: #{tpu_custom_call.1} parent=1 // pred_region
      _
    $region21: #{tpu_custom_call.1} parent=1 // pred_fallthru
      _
    // Predicated region
    $region22: #{tpu_custom_call.1} parent=1 // pred_check
      _
    $region23: #{tpu_custom_call.1} parent=1 // pred_check_branch
      %31 = sbr.rel (0) target = $region25
    $region24: #{tpu_custom_call.1} parent=1 // pred_region
      %32 = dma.done [#allocation3], 256
    $region25: #{tpu_custom_call.1} parent=1 // pred_fallthru
      _
    %v33 = vld [vmem:[#allocation2] sm:$0xff]
    %v34 = vld [vmem:[#allocation2 + $0x8] sm:$0xff]
    %v35 = vadd.f32 %v33, %v34
    %36 = vadd.xlane.f32.xlu0 %v35
    %v37 = vpop.xlane.xlu0 %36
    %v38 = vmul.f32 %v37, 0.00390625
    %v39 = vld [vmem:[%s1] sm:$0xff]
    %v40 = vld [vmem:[%s2] sm:$0x1]
    %v42 = vlaneseq
    %v43 = vand.u32 %v42, 127
    %v44 = vlaneseq
    %v45 = vshrl.u32 %v44, 7
    %v46 = vsub.s32 %v43, %v45
    %v47 = vrot.slane %v38, %v46
    %vm48 = vcmask 64512
    %v49 = vsel %vm48, %v47, 0
    %51 = vmatprep.subr.mxu0 0.0
    %52 = vmatpush1.msra.mxu0 0.0
    %53 = vmatprep.subr.mxu0 0.0
    %54 = vmatpush1.msra.mxu0 0.0
    %55 = vmatprep.subr.mxu0 0.0
    %56 = vmatpush1.msra.mxu0 0.0
    %57 = vmatprep.subr.mxu0 0.0
    %58 = vmatpush1.msra.mxu0 0.0
    %59 = vmatprep.subr.mxu0 0.0
    %60 = vmatpush1.msra.mxu0 0.0
    %61 = vmatprep.subr.mxu0 0.0
    %62 = vmatpush1.msra.mxu0 0.0
    %63 = vmatprep.subr.mxu0 0.0
    %64 = vmatpush1.msra.mxu0 0.0
    %65 = vmatprep.subr.mxu0 0.0
    %66 = vmatpush1.msra.mxu0 0.0
    %67 = vmatprep.subr.mxu0 0.0
    %68 = vmatpush1.msra.mxu0 0.0
    %69 = vmatprep.subr.mxu0 0.0
    %70 = vmatpush1.msra.mxu0 0.0
    %71 = vmatprep.subr.mxu0 0.0
    %72 = vmatpush1.msra.mxu0 0.0
    %73 = vmatprep.subr.mxu0 0.0
    %74 = vmatpush1.msra.mxu0 0.0
    %75 = vmatprep.subr.mxu0 0.0
    %76 = vmatpush1.msra.mxu0 0.0
    %77 = vmatprep.subr.mxu0 0.0
    %78 = vmatpush1.msra.mxu0 0.0
    %79 = vmatprep.subr.mxu0 0.0
    %80 = vmatpush1.msra.mxu0 0.0
    %81 = vmatprep.subr.mxu0 0.0
    %82 = vmatpush1.msra.mxu0 %v39
    %83 = vmatprep.subr.mxu0 0.0
    %84 = vmatpush2.msra.mxu0 0.0
    %85 = vmatprep.subr.mxu0 0.0
    %86 = vmatpush2.msra.mxu0 0.0
    %87 = vmatprep.subr.mxu0 0.0
    %88 = vmatpush2.msra.mxu0 0.0
    %89 = vmatprep.subr.mxu0 0.0
    %90 = vmatpush2.msra.mxu0 0.0
    %91 = vmatprep.subr.mxu0 0.0
    %92 = vmatpush2.msra.mxu0 0.0
    %93 = vmatprep.subr.mxu0 0.0
    %94 = vmatpush2.msra.mxu0 0.0
    %95 = vmatprep.subr.mxu0 0.0
    %96 = vmatpush2.msra.mxu0 0.0
    %97 = vmatprep.subr.mxu0 0.0
    %98 = vmatpush2.msra.mxu0 0.0
    %99 = vmatprep.subr.mxu0 0.0
    %100 = vmatpush2.msra.mxu0 0.0
    %101 = vmatprep.subr.mxu0 0.0
    %102 = vmatpush2.msra.mxu0 0.0
    %103 = vmatprep.subr.mxu0 0.0
    %104 = vmatpush2.msra.mxu0 0.0
    %105 = vmatprep.subr.mxu0 0.0
    %106 = vmatpush2.msra.mxu0 0.0
    %107 = vmatprep.subr.mxu0 0.0
    %108 = vmatpush2.msra.mxu0 0.0
    %109 = vmatprep.subr.mxu0 0.0
    %110 = vmatpush2.msra.mxu0 0.0
    %111 = vmatprep.subr.mxu0 0.0
    %112 = vmatpush2.msra.mxu0 0.0
    %113 = vmatprep.subr.mxu0 0.0
    %114 = vmatpush2.msra.mxu0 0.0
    %115 = vmatprep.mubr.f32.mxu0 0.0
    %116 = vmatmul.mubr.f32.gmra.mxu0 %v49
    %v117 = vpop.f32.mrf.mxu0
    %v118 = vadd.f32 %v40, %v117
    %v119 = vpop.f32.mrf.mxu0
    %120 = vdwg.mxu0
    %v121 = vxor.u32 %v118, 2147483648
    %v122 = vmul.f32 %v121, 1.442695
    %v123 = vpow.pop %v122
    %v124 = vadd.f32 %v123, 1.0
    %v125 = vrcp.pop %v124
    %v126 = vmul.f32 1.0, %v125
    %v127 = vmul.f32 %v118, %v126
    %v128 = vld [vmem:[%s3] sm:$0x3]
    %v129 = vld [vmem:[%s4] sm:$0x1]
    %vm130 = vcmask 15360
    %v132 = vsel %vm130, %v127, 0
    %vm134 = vcmask 1041408
    %v136 = vsel %vm134, %v128, 0
    %138 = vmatprep.subr.mxu0 0.0
    %139 = vmatpush1.msra.mxu0 0.0
    %140 = vmatprep.subr.mxu0 0.0
    %141 = vmatpush1.msra.mxu0 0.0
    %142 = vmatprep.subr.mxu0 0.0
    %143 = vmatpush1.msra.mxu0 0.0
    %144 = vmatprep.subr.mxu0 0.0
    %145 = vmatpush1.msra.mxu0 0.0
    %146 = vmatprep.subr.mxu0 0.0
    %147 = vmatpush1.msra.mxu0 0.0
    %148 = vmatprep.subr.mxu0 0.0
    %149 = vmatpush1.msra.mxu0 0.0
    %150 = vmatprep.subr.mxu0 0.0
    %151 = vmatpush1.msra.mxu0 0.0
    %152 = vmatprep.subr.mxu0 0.0
    %153 = vmatpush1.msra.mxu0 0.0
    %154 = vmatprep.subr.mxu0 0.0
    %155 = vmatpush1.msra.mxu0 0.0
    %156 = vmatprep.subr.mxu0 0.0
    %157 = vmatpush1.msra.mxu0 0.0
    %158 = vmatprep.subr.mxu0 0.0
    %159 = vmatpush1.msra.mxu0 0.0
    %160 = vmatprep.subr.mxu0 0.0
    %161 = vmatpush1.msra.mxu0 0.0
    %162 = vmatprep.subr.mxu0 0.0
    %163 = vmatpush1.msra.mxu0 0.0
    %164 = vmatprep.subr.mxu0 0.0
    %165 = vmatpush1.msra.mxu0 0.0
    %166 = vmatprep.subr.mxu0 0.0
    %167 = vmatpush1.msra.mxu0 0.0
    %168 = vmatprep.subr.mxu0 0.0
    %169 = vmatpush1.msra.mxu0 %v136
    %170 = vmatprep.subr.mxu0 0.0
    %171 = vmatpush2.msra.mxu0 0.0
    %172 = vmatprep.subr.mxu0 0.0
    %173 = vmatpush2.msra.mxu0 0.0
    %174 = vmatprep.subr.mxu0 0.0
    %175 = vmatpush2.msra.mxu0 0.0
    %176 = vmatprep.subr.mxu0 0.0
    %177 = vmatpush2.msra.mxu0 0.0
    %178 = vmatprep.subr.mxu0 0.0
    %179 = vmatpush2.msra.mxu0 0.0
    %180 = vmatprep.subr.mxu0 0.0
    %181 = vmatpush2.msra.mxu0 0.0
    %182 = vmatprep.subr.mxu0 0.0
    %183 = vmatpush2.msra.mxu0 0.0
    %184 = vmatprep.subr.mxu0 0.0
    %185 = vmatpush2.msra.mxu0 0.0
    %186 = vmatprep.subr.mxu0 0.0
    %187 = vmatpush2.msra.mxu0 0.0
    %188 = vmatprep.subr.mxu0 0.0
    %189 = vmatpush2.msra.mxu0 0.0
    %190 = vmatprep.subr.mxu0 0.0
    %191 = vmatpush2.msra.mxu0 0.0
    %192 = vmatprep.subr.mxu0 0.0
    %193 = vmatpush2.msra.mxu0 0.0
    %194 = vmatprep.subr.mxu0 0.0
    %195 = vmatpush2.msra.mxu0 0.0
    %196 = vmatprep.subr.mxu0 0.0
    %197 = vmatpush2.msra.mxu0 0.0
    %198 = vmatprep.subr.mxu0 0.0
    %199 = vmatpush2.msra.mxu0 0.0
    %200 = vmatprep.subr.mxu0 0.0
    %201 = vmatpush2.msra.mxu0 0.0
    %202 = vmatprep.mubr.f32.mxu0 0.0
    %203 = vmatmul.mubr.f32.gmra.mxu0 %v132
    %v204 = vpop.f32.mrf.mxu0
    %v205 = vadd.f32 %v129, %v204
    %v206 = vpop.f32.mrf.mxu0
    %207 = vdwg.mxu0
    %v208 = vxor.u32 %v205, 2147483648
    %v209 = vmul.f32 %v208, 1.442695
    %v210 = vpow.pop %v209
    %v211 = vadd.f32 %v210, 1.0
    %v212 = vrcp.pop %v211
    %v213 = vmul.f32 1.0, %v212
    %v214 = vlaneseq
    %v215 = vshrl.u32 %v214, 7
    %v216 = vsub.s32 0, %v215
    %v217 = vrot.slane %v213, %v216
    %219 = vbcast.lane.b32.xlu0 %v217, 256
    %v220 = vpop.permute.xlu0 %219
    %v221 = vmul.f32 %v33, %v220
    %v222 = vmul.f32 %v34, %v220
    %223 = vst [vmem:[#allocation5] sm:$0xff] %v221
    %224 = vst [vmem:[#allocation5 + $0x8] sm:$0xff] %v222
    // Predicated region
    $region26: #{tpu_custom_call.1} parent=1 // pred_check
      _
    $region27: #{tpu_custom_call.1} parent=1 // pred_check_branch
      %226 = sbr.rel (0) target = $region29
    $region28: #{tpu_custom_call.1} parent=1 // pred_region
      %s228 = ssub.s32 256, 256
      %229 = vsyncadd [#allocation4], %s228
      %s231 = sshll.u32 [#allocation5], 4
      %s232 = int_to_ptr.vmem [resolvable:$true] %s231
      %234 = dma.vmem_to_hbm [thread:$0]  %s232, 256, %s5, [#allocation4]
    $region29: #{tpu_custom_call.1} parent=1 // pred_fallthru
      _
    // Predicated region
    $region30: #{tpu_custom_call.1} parent=1 // pred_check
      _
    $region31: #{tpu_custom_call.1} parent=1 // pred_check_branch
      %236 = sbr.rel (0) target = $region33
    $region32: #{tpu_custom_call.1} parent=1 // pred_region
      %237 = dma.done [#allocation4], 256
    $region33: #{tpu_custom_call.1} parent=1 // pred_fallthru
      _
    %238 = vsyncpa [#allocation3], 1
    %239 = vsyncpa [#allocation4], 1

</llo_original>
